<compile_context>
chip_gen: v7x
topology: tpu7x:2x2x1
jax: 0.10.0
libtpu: 0.0.40
codegen_flags: <defaults>
</compile_context>

<pallas_src>
import math

import jax
import jax.numpy as jnp
from jax.experimental import pallas as pl
from jax.experimental.pallas import tpu as pltpu


def _round_up(x, m):
    return ((x + m - 1) // m) * m


def fused_gat_kernel(x_ref, adj_ref, w_ref, out_ref, act_ref):
    """All GAT layers fused; grid axis 0 = layer index ("arbitrary").

    x_ref   : (N_pad, DIM)    bf16  padded node features (resident, read at layer 0)
    adj_ref : (N_pad, N_pad)  bf16  padded adjacency (resident across all layers)
    w_ref   : (1, DIM, DIM)   bf16  current layer's zero-padded weight
    out_ref : (N_pad, DIM)    f32   final activations (written back once, at the end)
    act_ref : (N_pad, DIM)    bf16  VMEM scratch carrying activations across layers
    """
    layer = pl.program_id(0)
    last = pl.num_programs(0) - 1

    @pl.when(layer == 0)
    def _init():
        act_ref[...] = x_ref[...]

    # h = act @ W_layer          (bf16 operands, f32 accumulation on the MXU)
    h = jnp.dot(act_ref[...], w_ref[0], preferred_element_type=jnp.float32)
    # h' = adj @ h               (bf16 operands, f32 accumulation on the MXU)
    hp = jnp.dot(adj_ref[...], h.astype(adj_ref.dtype),
                 preferred_element_type=jnp.float32)
    # ELU(alpha=1).  Clamp before exp so the untaken branch never produces inf.
    act = jnp.where(hp > 0.0, hp, jnp.exp(jnp.minimum(hp, 0.0)) - 1.0)

    act_ref[...] = act.astype(act_ref.dtype)

    @pl.when(layer == last)
    def _finalize():
        out_ref[...] = act


def embedding_gat_forward(x, adj, weights):
    """x: (N, nfeat) f32, adj: (N, N) f32, weights: list of (in_dim, nhid*nheads) f32.

    Returns (N, nhid*nheads) f32 after len(weights) fused GAT layers
    (eval-mode forward of `embedding_gat`).
    """
    n, nfeat = x.shape
    out_dim = weights[0].shape[1]
    nlayer = len(weights)

    # Padded, lane-dense sizes.
    dim = _round_up(max(nfeat, out_dim), 128)
    n_pad = _round_up(n, 128)

    bf16 = jnp.bfloat16
    x_p = jnp.zeros((n_pad, dim), bf16).at[:n, :nfeat].set(x.astype(bf16))
    adj_p = jnp.zeros((n_pad, n_pad), bf16).at[:n, :n].set(adj.astype(bf16))
    w_p = jnp.stack([
        jnp.zeros((dim, dim), bf16).at[:w.shape[0], :w.shape[1]].set(w.astype(bf16))
        for w in weights
    ])  # (nlayer, dim, dim)

    out = pl.pallas_call(
        fused_gat_kernel,
        out_shape=jax.ShapeDtypeStruct((n_pad, dim), jnp.float32),
        grid_spec=pltpu.PrefetchScalarGridSpec(
            num_scalar_prefetch=0,
            grid=(nlayer,),
            in_specs=[
                pl.BlockSpec((n_pad, dim), lambda l: (0, 0)),      # x   (resident)
                pl.BlockSpec((n_pad, n_pad), lambda l: (0, 0)),    # adj (resident)
                pl.BlockSpec((1, dim, dim), lambda l: (l, 0, 0)),  # W[layer]
            ],
            out_specs=pl.BlockSpec((n_pad, dim), lambda l: (0, 0)),
            scratch_shapes=[pltpu.VMEM((n_pad, dim), bf16)],       # activations
        ),
        compiler_params=pltpu.CompilerParams(
            # layer axis carries a dependency through the scratch => arbitrary
            dimension_semantics=("arbitrary",),
        ),
    )(x_p, adj_p, w_p)

    return out[:n, :out_dim]


def xavier_uniform(key, shape, gain=1.414):
    fan_in, fan_out = shape
    bound = gain * math.sqrt(6.0 / (fan_in + fan_out))
    return jax.random.uniform(key, shape, jnp.float32, -bound, bound)


def init_embedding_gat_params(key, nfeat, nhid, nheads, nlayer):
    """Per layer: nheads Xavier weights (in_dim, nhid), concatenated along columns."""
    params = []
    in_dim = nfeat
    for _ in range(nlayer):
        heads = []
        for _ in range(nheads):
            key, sub = jax.random.split(key)
            heads.append(xavier_uniform(sub, (in_dim, nhid)))
        params.append(jnp.concatenate(heads, axis=1))
        in_dim = nhid * nheads
    return params


if __name__ == "__main__":
    # Small, module-consistent shapes.
    N = 16        # number of graph nodes
    nfeat = 16    # input feature dim
    nhid = 8      # hidden dim per head
    nheads = 4    # attention heads
    nlayer = 2    # layers

    key = jax.random.PRNGKey(0)
    k_x, k_adj, k_w = jax.random.split(key, 3)

    x = jax.random.normal(k_x, (N, nfeat), dtype=jnp.float32)
    # deterministic dense binary adjacency with self-loops
    adj = (jax.random.uniform(k_adj, (N, N)) > 0.5).astype(jnp.float32)
    adj = jnp.maximum(adj, jnp.eye(N, dtype=jnp.float32))

    weights = init_embedding_gat_params(k_w, nfeat, nhid, nheads, nlayer)

    out = embedding_gat_forward(x, adj, weights)
    out = jax.block_until_ready(out)
    assert out.shape == (N, nhid * nheads), out.shape

    # Pure-JAX reference with the same bf16 / f32-accumulation numerics.
    act = x.astype(jnp.bfloat16)
    adj_bf = adj.astype(jnp.bfloat16)
    ref = None
    for w in weights:
        h = jnp.dot(act, w.astype(jnp.bfloat16), preferred_element_type=jnp.float32)
        hp = jnp.dot(adj_bf, h.astype(jnp.bfloat16), preferred_element_type=jnp.float32)
        ref = jnp.where(hp > 0.0, hp, jnp.exp(jnp.minimum(hp, 0.0)) - 1.0)
        act = ref.astype(jnp.bfloat16)

    assert jnp.allclose(out, ref, atol=1e-3, rtol=1e-3), float(
        jnp.max(jnp.abs(out - ref)))

    print("KERNEL_OK")
</pallas_src>

<mosaic_0001>
module attributes {stable_mosaic.version = 11 : i64} {
  func.func @fused_gat_kernel(%arg0: i32, %arg1: memref<128x128xbf16, #tpu.memory_space<vmem>>, %arg2: memref<128x128xbf16, #tpu.memory_space<vmem>>, %arg3: memref<1x128x128xbf16, #tpu.memory_space<vmem>>, %arg4: memref<128x128xf32, #tpu.memory_space<vmem>>, %arg5: memref<128x128xbf16, #tpu.memory_space<vmem>>) attributes {dimension_semantics = [#tpu.dimension_semantics<arbitrary>], iteration_bounds = array<i64: 2>, scalar_prefetch = 0 : i64, scratch_operands = 1 : i64, tpu.core_type = #tpu.core_type<tc>, window_params = [{pipeline_mode = #tpu.pipeline_mode<synchronous>, transform_indices = @transform_0, window_bounds = array<i64: 128, 128>}, {pipeline_mode = #tpu.pipeline_mode<synchronous>, transform_indices = @transform_1, window_bounds = array<i64: 128, 128>}, {transform_indices = @transform_2, window_bounds = array<i64: 1, 128, 128>}, {pipeline_mode = #tpu.pipeline_mode<synchronous>, transform_indices = @transform_3, window_bounds = array<i64: 128, 128>}]} {
    %c0_i32 = arith.constant 0 : i32
    %0 = arith.cmpi eq, %arg0, %c0_i32 : i32
    %1 = arith.extui %0 : i1 to i32
    %c0_i32_0 = arith.constant 0 : i32
    %2 = arith.cmpi ne, %1, %c0_i32_0 : i32
    scf.if %2 {
      %c0_14 = arith.constant 0 : index
      %c0_15 = arith.constant 0 : index
      %23 = vector.load %arg1[%c0_14, %c0_15] : memref<128x128xbf16, #tpu.memory_space<vmem>>, vector<128x128xbf16>
      %c0_16 = arith.constant 0 : index
      %c0_17 = arith.constant 0 : index
      %24 = vector.load %arg5[%c0_16, %c0_17] : memref<128x128xbf16, #tpu.memory_space<vmem>>, vector<128x128xbf16>
      tpu.vector_store %arg5[%c0_16, %c0_17], %23 {strides = array<i32>} : memref<128x128xbf16, #tpu.memory_space<vmem>>, vector<128x128xbf16>,
    } else {
    }
    %c0 = arith.constant 0 : index
    %c0_1 = arith.constant 0 : index
    %3 = vector.load %arg5[%c0, %c0_1] : memref<128x128xbf16, #tpu.memory_space<vmem>>, vector<128x128xbf16>
    %c0_2 = arith.constant 0 : index
    %c0_3 = arith.constant 0 : index
    %c0_4 = arith.constant 0 : index
    %4 = vector.load %arg3[%c0_2, %c0_3, %c0_4] : memref<1x128x128xbf16, #tpu.memory_space<vmem>>, vector<1x128x128xbf16>
    %5 = vector.shape_cast %4 : vector<1x128x128xbf16> to vector<128x128xbf16>
    %cst = arith.constant dense<0.000000e+00> : vector<128x128xf32>
    %6 = tpu.matmul %3, %5, %cst {dimension_numbers = #tpu.dot_dimension_numbers<[1], [0], [0], [1], [0, 0, 1, 1], [], []>} : vector<128x128xbf16>, vector<128x128xbf16>, vector<128x128xf32> -> vector<128x128xf32>
    %c0_5 = arith.constant 0 : index
    %c0_6 = arith.constant 0 : index
    %7 = vector.load %arg2[%c0_5, %c0_6] : memref<128x128xbf16, #tpu.memory_space<vmem>>, vector<128x128xbf16>
    %8 = arith.truncf %6 : vector<128x128xf32> to vector<128x128xbf16>
    %cst_7 = arith.constant dense<0.000000e+00> : vector<128x128xf32>
    %9 = tpu.matmul %7, %8, %cst_7 {dimension_numbers = #tpu.dot_dimension_numbers<[1], [0], [0], [1], [0, 0, 1, 1], [], []>} : vector<128x128xbf16>, vector<128x128xbf16>, vector<128x128xf32> -> vector<128x128xf32>
    %cst_8 = arith.constant 0.000000e+00 : f32
    %10 = vector.broadcast %cst_8 : f32 to vector<128x128xf32>
    %11 = arith.cmpf ogt, %9, %10 : vector<128x128xf32>
    %cst_9 = arith.constant 0.000000e+00 : f32
    %12 = vector.broadcast %cst_9 : f32 to vector<128x128xf32>
    %13 = arith.minimumf %9, %12 : vector<128x128xf32>
    %14 = math.exp %13 : vector<128x128xf32>
    %cst_10 = arith.constant 1.000000e+00 : f32
    %15 = vector.broadcast %cst_10 : f32 to vector<128x128xf32>
    %16 = arith.subf %14, %15 : vector<128x128xf32>
    %17 = arith.select %11, %9, %16 : vector<128x128xi1>, vector<128x128xf32>
    %18 = arith.truncf %17 : vector<128x128xf32> to vector<128x128xbf16>
    %c0_11 = arith.constant 0 : index
    %c0_12 = arith.constant 0 : index
    %19 = vector.load %arg5[%c0_11, %c0_12] : memref<128x128xbf16, #tpu.memory_space<vmem>>, vector<128x128xbf16>
    tpu.vector_store %arg5[%c0_11, %c0_12], %18 {strides = array<i32>} : memref<128x128xbf16, #tpu.memory_space<vmem>>, vector<128x128xbf16>,
    %c1_i32 = arith.constant 1 : i32
    %20 = arith.cmpi eq, %arg0, %c1_i32 : i32
    %21 = arith.extui %20 : i1 to i32
    %c0_i32_13 = arith.constant 0 : i32
    %22 = arith.cmpi ne, %21, %c0_i32_13 : i32
    scf.if %22 {
      %c0_14 = arith.constant 0 : index
      %c0_15 = arith.constant 0 : index
      %23 = vector.load %arg4[%c0_14, %c0_15] : memref<128x128xf32, #tpu.memory_space<vmem>>, vector<128x128xf32>
      tpu.vector_store %arg4[%c0_14, %c0_15], %17 {strides = array<i32>} : memref<128x128xf32, #tpu.memory_space<vmem>>, vector<128x128xf32>,
    } else {
    }
    return
  }
  func.func @transform_0(%arg0: i32) -> (i32, i32) {
    %c0_i32 = arith.constant 0 : i32
    %c0_i32_0 = arith.constant 0 : i32
    %c0_i32_1 = arith.constant 0 : i32
    return %c0_i32, %c0_i32_0 : i32, i32
  }
  func.func @transform_1(%arg0: i32) -> (i32, i32) {
    %c0_i32 = arith.constant 0 : i32
    %c0_i32_0 = arith.constant 0 : i32
    %c0_i32_1 = arith.constant 0 : i32
    return %c0_i32, %c0_i32_0 : i32, i32
  }
  func.func @transform_2(%arg0: i32) -> (i32, i32, i32) {
    %c0_i32 = arith.constant 0 : i32
    %c0_i32_0 = arith.constant 0 : i32
    %c0_i32_1 = arith.constant 0 : i32
    return %arg0, %c0_i32, %c0_i32_0 : i32, i32, i32
  }
  func.func @transform_3(%arg0: i32) -> (i32, i32) {
    %c0_i32 = arith.constant 0 : i32
    %c0_i32_0 = arith.constant 0 : i32
    %c0_i32_1 = arith.constant 0 : i32
    return %c0_i32, %c0_i32_0 : i32, i32
  }
}

</mosaic_0001>

<llo_original>
// kernel: tpu_custom_call.1
$region0: #{tpu_custom_call.1}
  #allocation0 [shape = 'u32[]', space=smem, size = 0x4, offset = 0x4, fixed_abs, tag = 'smem constant byte address 0x4 - core index']
  #allocation1 [shape = 'u32[144,128]{1,0:T(1,128)}', space=vmem, size = 0x12000, scoped, tag = 'internal scratch']
  #allocation2 [shape = 'bf16[128,128]{1,0:T(16,128)(2,1)}', space=vmem, size = 0x8000, scoped, tag = 'scratch operand']
  %s0 = inlined_call_operand.hbm [shape: bf16[128,128], index: 0, kind: input, shape index: {}]
  %s1 = inlined_call_operand.hbm [shape: bf16[128,128], index: 1, kind: input, shape index: {}]
  %s2 = inlined_call_operand.hbm [shape: bf16[2,128,128], index: 2, kind: input, shape index: {}]
  %s3 = inlined_call_operand.hbm [shape: f32[128,128], index: 3, kind: output, shape index: {}]
  %s4 = sld [smem:[#allocation0]]
  $region65: #{tpu_custom_call.1} parent=0
    _
  %s6 = ssub.s32 1, %s4
  %s7 = scalar_select 0, %s6, %s4
  $region1: #{tpu_custom_call.1} parent=0
    #allocation3 [shape = 'u8[32768]{0}', space=vmem, size = 0x8000, scoped, tag = 'input window, operand 0, single buffered']
    #allocation4 [shape = 's32[2]{0}', space=sflag, size = 0x8, scoped, tag = 'scoped memory for tpu_custom_call.1']
    #allocation5 [shape = 's32[2]{0}', space=sflag, size = 0x8, scoped, tag = 'scoped memory for tpu_custom_call.1']
    #allocation6 [shape = 'u8[32768]{0}', space=vmem, size = 0x8000, scoped, tag = 'input window, operand 1, single buffered']
    #allocation7 [shape = 's32[1]{0}', space=sflag, size = 0x4, scoped, tag = 'scoped memory for tpu_custom_call.1']
    #allocation8 [shape = 'u8[65536]{0}', space=vmem, size = 0x10000, scoped, tag = 'input window, operand 2']
    #allocation9 [shape = 'u8[65536]{0}', space=vmem, size = 0x10000, scoped, tag = 'output window, operand 0, single buffered']
    %8 = vsyncpa [#allocation4], 0
    %9 = vsyncpa [#allocation7], 0
    %10 = vsyncpa [#allocation5], 0
    loop: start=0, step=1, limit=4
    $region2: #{tpu_custom_call.1} parent=1 // loop_pre_header
      _
    $region3: #{tpu_custom_call.1} parent=1 // loop_header
      %s12 = sphi 0, %s16
      %p13 = scmp.ge.s32.totalorder %s12, 4
      %s20 = sphi 0, %s20
      %s22 = sphi 0, %s20
      %s23 = sphi 0, %s22
      %s37 = sphi 0, %s23
      %s41 = sphi 0, %s41
      %s43 = sphi 0, %s41
      %s44 = sphi 0, %s43
      %s58 = sphi 0, %s44
      %s64 = sphi 0, %s66
      %s67 = sphi 0, %s64
      %s68 = sphi 0, %s67
      %s84 = sphi 0, %s68
      %s88 = sphi 0, %s88
      %s90 = sphi 0, %s88
      %s91 = sphi 0, %s90
      %s105 = sphi 0, %s91
    $region4: #{tpu_custom_call.1} parent=1 // loop_header_branch
      %15 = sbr.rel (%p13) target = $region8
    $region5: #{tpu_custom_call.1} parent=1 // loop_body
      %s17 = ssub.s32 %s12, 1
      %s18 = ssub.s32 %s12, 2
      %s19 = sadd.s32 %s12, 1
      %s21 = sadd.s32 %s20, 1
      %p24 = scmp.eq.s32.totalorder %s12, 1
      %p25 = scmp.ne.s32.totalorder %s20, %s22
      %p26 = scmp.eq.s32.totalorder %s12, 0
      %p27 = por %p25, %p26
      %p28 = scmp.ne.s32.totalorder %s20, %s22
      %p29 = scmp.eq.s32.totalorder %s17, 1
      %p30 = por %p28, %p29
      %p31 = scmp.ne.s32.totalorder %s22, %s23
      %p32 = scmp.eq.s32.totalorder %s17, 0
      %p33 = por %p31, %p32
      %p34 = scmp.ne.s32.totalorder %s22, %s23
      %p35 = scmp.eq.s32.totalorder %s18, 1
      %p36 = por %p34, %p35
      %p38 = scmp.ne.s32.totalorder %s23, %s37
      %p39 = scmp.eq.s32.totalorder %s18, 0
      %p40 = por %p38, %p39
      %s42 = sadd.s32 %s41, 1
      %p45 = scmp.eq.s32.totalorder %s12, 1
      %p46 = scmp.ne.s32.totalorder %s41, %s43
      %p47 = scmp.eq.s32.totalorder %s12, 0
      %p48 = por %p46, %p47
      %p49 = scmp.ne.s32.totalorder %s41, %s43
      %p50 = scmp.eq.s32.totalorder %s17, 1
      %p51 = por %p49, %p50
      %p52 = scmp.ne.s32.totalorder %s43, %s44
      %p53 = scmp.eq.s32.totalorder %s17, 0
      %p54 = por %p52, %p53
      %p55 = scmp.ne.s32.totalorder %s43, %s44
      %p56 = scmp.eq.s32.totalorder %s18, 1
      %p57 = por %p55, %p56
      %p59 = scmp.ne.s32.totalorder %s44, %s58
      %p60 = scmp.eq.s32.totalorder %s18, 0
      %p61 = por %p59, %p60
      %s62 = ssub.s32 %s12, %s19
      %p63 = scmp.eq.s32.totalorder %s62, 0
      %s65 = sadd.s32 %s64, 1
      %s66 = scalar_select %p63, %s64, %s65
      %p69 = pneg %p63
      %p70 = scmp.eq.s32.totalorder %s12, 1
      %p71 = por %p69, %p70
      %p72 = scmp.ne.s32.totalorder %s64, %s67
      %p73 = scmp.eq.s32.totalorder %s12, 0
      %p74 = por %p72, %p73
      %p75 = scmp.ne.s32.totalorder %s64, %s67
      %p76 = scmp.eq.s32.totalorder %s17, 1
      %p77 = por %p75, %p76
      %p78 = scmp.ne.s32.totalorder %s67, %s68
      %p79 = scmp.eq.s32.totalorder %s17, 0
      %p80 = por %p78, %p79
      %p81 = scmp.ne.s32.totalorder %s67, %s68
      %p82 = scmp.eq.s32.totalorder %s18, 1
      %p83 = por %p81, %p82
      %p85 = scmp.ne.s32.totalorder %s68, %s84
      %p86 = scmp.eq.s32.totalorder %s18, 0
      %p87 = por %p85, %p86
      %s89 = sadd.s32 %s88, 1
      %p92 = scmp.eq.s32.totalorder %s12, 1
      %p93 = scmp.ne.s32.totalorder %s88, %s90
      %p94 = scmp.eq.s32.totalorder %s12, 0
      %p95 = por %p93, %p94
      %p96 = scmp.ne.s32.totalorder %s88, %s90
      %p97 = scmp.eq.s32.totalorder %s17, 1
      %p98 = por %p96, %p97
      %p99 = scmp.ne.s32.totalorder %s90, %s91
      %p100 = scmp.eq.s32.totalorder %s17, 0
      %p101 = por %p99, %p100
      %p102 = scmp.ne.s32.totalorder %s90, %s91
      %p103 = scmp.eq.s32.totalorder %s18, 1
      %p104 = por %p102, %p103
      %p106 = scmp.ne.s32.totalorder %s91, %s105
      %p107 = scmp.eq.s32.totalorder %s18, 0
      %p108 = por %p106, %p107
      %p109 = scmp.le.s32.totalorder 1, %s12
      %p110 = scmp.lt.s32.totalorder %s12, 3
      %p111 = pnand %p109, %p110
      %p112 = pneg %p111
      // Predicated region
      $region9: #{tpu_custom_call.1} parent=5 // pred_check
        _
      $region10: #{tpu_custom_call.1} parent=5 // pred_check_branch
        %114 = sbr.rel (%p111) target = $region12
      $region11: #{tpu_custom_call.1} parent=5 // pred_region
        %s115 = ssub.s32 %s12, 1
        // Predicated region
        $region13: #{tpu_custom_call.1} parent=11 // pred_check
          %p116 = pneg %p33
        $region14: #{tpu_custom_call.1} parent=11 // pred_check_branch
          %118 = sbr.rel (%p116) target = $region16
        $region15: #{tpu_custom_call.1} parent=11 // pred_region
          %s120 = ssub.s32 1024, 1024
          %121 = vsyncadd [#allocation4], %s120
          %s122 = sshll.u32 [#allocation3], 4
          %s123 = int_to_ptr.vmem [resolvable:$true] %s122
          %128 = dma.hbm_to_vmem [thread:$0]  %s0, 1024, %s123, [#allocation4], 64, 64, 4
        $region16: #{tpu_custom_call.1} parent=11 // pred_fallthru
          _
        // Predicated region
        $region17: #{tpu_custom_call.1} parent=11 // pred_check
          %p129 = pneg %p54
        $region18: #{tpu_custom_call.1} parent=11 // pred_check_branch
          %131 = sbr.rel (%p129) target = $region20
        $region19: #{tpu_custom_call.1} parent=11 // pred_region
          %s133 = ssub.s32 1024, 1024
          %134 = vsyncadd [#allocation7], %s133
          %s135 = sshll.u32 [#allocation6], 4
          %s136 = int_to_ptr.vmem [resolvable:$true] %s135
          %141 = dma.hbm_to_vmem [thread:$0]  %s1, 1024, %s136, [#allocation7], 64, 64, 4
        $region20: #{tpu_custom_call.1} parent=11 // pred_fallthru
          _
      $region12: #{tpu_custom_call.1} parent=5 // pred_fallthru
        _
      %p142 = scmp.lt.s32.totalorder %s12, 2
      // Predicated region
      $region21: #{tpu_custom_call.1} parent=5 // pred_check
        %p143 = pneg %p142
      $region22: #{tpu_custom_call.1} parent=5 // pred_check_branch
        %145 = sbr.rel (%p143) target = $region24
      $region23: #{tpu_custom_call.1} parent=5 // pred_region
        // Predicated region
        $region25: #{tpu_custom_call.1} parent=23 // pred_check
          %p146 = pneg %p74
        $region26: #{tpu_custom_call.1} parent=23 // pred_check_branch
          %148 = sbr.rel (%p146) target = $region28
        $region27: #{tpu_custom_call.1} parent=23 // pred_region
          %s149 = sand.u32 %s12, 1
          %s150 = scalar_lea.sflag [#allocation4], %s149
          %s151 = sand.u32 %s64, 1
          %s152 = smul.addr %s151, 64
          %s153 = scalar_lea.vmem [#allocation8], %s152
          %s155 = ssub.s32 1024, 1024
          %156 = vsyncadd %s150, %s155
          %s157 = smul.addr %s12, 16
          %s158 = smul.addr %s157, 64
          %s159 = scalar_lea.hbm %s2, %s158
          %s160 = sshll.u32 %s153, 4
          %s161 = int_to_ptr.vmem [resolvable:$true] %s160
          %166 = dma.hbm_to_vmem [thread:$0]  %s159, 1024, %s161, %s150, 64, 64, 4
        $region28: #{tpu_custom_call.1} parent=23 // pred_fallthru
          _
      $region24: #{tpu_custom_call.1} parent=5 // pred_fallthru
        _
      %p167 = scmp.le.s32.totalorder 1, %s12
      %p168 = scmp.lt.s32.totalorder %s12, 3
      %p169 = pnand %p167, %p168
      %p170 = pneg %p169
      // Predicated region
      $region29: #{tpu_custom_call.1} parent=5 // pred_check
        _
      $region30: #{tpu_custom_call.1} parent=5 // pred_check_branch
        %172 = sbr.rel (%p169) target = $region32
      $region31: #{tpu_custom_call.1} parent=5 // pred_region
        %s173 = ssub.s32 %s12, 1
        // Predicated region
        $region33: #{tpu_custom_call.1} parent=31 // pred_check
          %p174 = pneg %p33
        $region34: #{tpu_custom_call.1} parent=31 // pred_check_branch
          %176 = sbr.rel (%p174) target = $region36
        $region35: #{tpu_custom_call.1} parent=31 // pred_region
          %177 = dma.done [#allocation4], 1024
        $region36: #{tpu_custom_call.1} parent=31 // pred_fallthru
          _
        // Predicated region
        $region37: #{tpu_custom_call.1} parent=31 // pred_check
          %p178 = pneg %p54
        $region38: #{tpu_custom_call.1} parent=31 // pred_check_branch
          %180 = sbr.rel (%p178) target = $region40
        $region39: #{tpu_custom_call.1} parent=31 // pred_region
          %181 = dma.done [#allocation7], 1024
        $region40: #{tpu_custom_call.1} parent=31 // pred_fallthru
          _
        %s182 = sand.u32 %s17, 1
        %s183 = scalar_lea.sflag [#allocation4], %s182
        %s184 = sand.u32 %s67, 1
        %s185 = smul.addr %s184, 64
        %s186 = scalar_lea.vmem [#allocation8], %s185
        // Predicated region
        $region41: #{tpu_custom_call.1} parent=31 // pred_check
          %p187 = pneg %p80
        $region42: #{tpu_custom_call.1} parent=31 // pred_check_branch
          %189 = sbr.rel (%p187) target = $region44
        $region43: #{tpu_custom_call.1} parent=31 // pred_region
          %190 = dma.done %s183, 1024
        $region44: #{tpu_custom_call.1} parent=31 // pred_fallthru
          _
        %p191 = pneg %p33
        %p192 = pneg %p30
        %p193 = pneg %p54
        %p194 = pneg %p51
        %s195 = sand.u32 %s17, 1
        %s196 = scalar_lea.sflag [#allocation4], %s195
        %s197 = sand.u32 %s67, 1
        %s198 = smul.addr %s197, 64
        %s199 = scalar_lea.vmem [#allocation8], %s198
        %p200 = pneg %p80
        %p201 = pneg %p77
        %p202 = pneg %p101
        %p203 = pneg %p98
        %p205 = scmp.eq.s32.totalorder %s17, 0
        // Predicated region
        $region45: #{tpu_custom_call.1} parent=31 // pred_check
          %p206 = pneg %p205
        $region46: #{tpu_custom_call.1} parent=31 // pred_check_branch
          %208 = sbr.rel (%p206) target = $region48
        $region47: #{tpu_custom_call.1} parent=31 // pred_region
          %v209 = vld [vmem:[#allocation3] sm:$0xf]
          %v210 = vld [vmem:[#allocation3 + $0x4] sm:$0xf]
          %v211 = vld [vmem:[#allocation3 + $0x8] sm:$0xf]
          %v212 = vld [vmem:[#allocation3 + $0xc] sm:$0xf]
          %v213 = vld [vmem:[#allocation3 + $0x10] sm:$0xf]
          %v214 = vld [vmem:[#allocation3 + $0x14] sm:$0xf]
          %v215 = vld [vmem:[#allocation3 + $0x18] sm:$0xf]
          %v216 = vld [vmem:[#allocation3 + $0x1c] sm:$0xf]
          %v217 = vld [vmem:[#allocation3 + $0x20] sm:$0xf]
          %v218 = vld [vmem:[#allocation3 + $0x24] sm:$0xf]
          %v219 = vld [vmem:[#allocation3 + $0x28] sm:$0xf]
          %v220 = vld [vmem:[#allocation3 + $0x2c] sm:$0xf]
          %v221 = vld [vmem:[#allocation3 + $0x30] sm:$0xf]
          %v222 = vld [vmem:[#allocation3 + $0x34] sm:$0xf]
          %v223 = vld [vmem:[#allocation3 + $0x38] sm:$0xf]
          %v224 = vld [vmem:[#allocation3 + $0x3c] sm:$0xf]
          %v241 = vunpack.c.l.b16 %v209
          %v242 = vunpack.c.l.b16 %v210
          %v243 = vunpack.c.l.b16 %v211
          %v244 = vunpack.c.l.b16 %v212
          %v245 = vunpack.c.l.b16 %v213
          %v246 = vunpack.c.l.b16 %v214
          %v247 = vunpack.c.l.b16 %v215
          %v248 = vunpack.c.l.b16 %v216
          %v249 = vunpack.c.l.b16 %v217
          %v250 = vunpack.c.l.b16 %v218
          %v251 = vunpack.c.l.b16 %v219
          %v252 = vunpack.c.l.b16 %v220
          %v253 = vunpack.c.l.b16 %v221
          %v254 = vunpack.c.l.b16 %v222
          %v255 = vunpack.c.l.b16 %v223
          %v256 = vunpack.c.l.b16 %v224
          %v257 = vpack.c.b16 %v242, %v241
          %v258 = vpack.c.b16 %v244, %v243
          %v259 = vpack.c.b16 %v246, %v245
          %v260 = vpack.c.b16 %v248, %v247
          %v261 = vpack.c.b16 %v250, %v249
          %v262 = vpack.c.b16 %v252, %v251
          %v263 = vpack.c.b16 %v254, %v253
          %v264 = vpack.c.b16 %v256, %v255
          %273 = vst [vmem:[#allocation2] sm:$0xff] %v257
          %274 = vst [vmem:[#allocation2 + $0x8] sm:$0xff] %v258
          %275 = vst [vmem:[#allocation2 + $0x10] sm:$0xff] %v259
          %276 = vst [vmem:[#allocation2 + $0x18] sm:$0xff] %v260
          %277 = vst [vmem:[#allocation2 + $0x20] sm:$0xff] %v261
          %278 = vst [vmem:[#allocation2 + $0x28] sm:$0xff] %v262
          %279 = vst [vmem:[#allocation2 + $0x30] sm:$0xff] %v263
          %280 = vst [vmem:[#allocation2 + $0x38] sm:$0xff] %v264
        $region48: #{tpu_custom_call.1} parent=31 // pred_fallthru
          _
        %v281 = vld [vmem:[#allocation2] sm:$0xff]
        %v282 = vld [vmem:[#allocation2 + $0x8] sm:$0xff]
        %v283 = vld [vmem:[#allocation2 + $0x10] sm:$0xff]
        %v284 = vld [vmem:[#allocation2 + $0x18] sm:$0xff]
        %v285 = vld [vmem:[#allocation2 + $0x20] sm:$0xff]
        %v286 = vld [vmem:[#allocation2 + $0x28] sm:$0xff]
        %v287 = vld [vmem:[#allocation2 + $0x30] sm:$0xff]
        %v288 = vld [vmem:[#allocation2 + $0x38] sm:$0xff]
        %v289 = vld [vmem:[%s186] sm:$0xf]
        %v290 = vld [vmem:[%s186 + $0x4] sm:$0xf]
        %v291 = vld [vmem:[%s186 + $0x8] sm:$0xf]
        %v292 = vld [vmem:[%s186 + $0xc] sm:$0xf]
        %v293 = vld [vmem:[%s186 + $0x10] sm:$0xf]
        %v294 = vld [vmem:[%s186 + $0x14] sm:$0xf]
        %v295 = vld [vmem:[%s186 + $0x18] sm:$0xf]
        %v296 = vld [vmem:[%s186 + $0x1c] sm:$0xf]
        %v297 = vld [vmem:[%s186 + $0x20] sm:$0xf]
        %v298 = vld [vmem:[%s186 + $0x24] sm:$0xf]
        %v299 = vld [vmem:[%s186 + $0x28] sm:$0xf]
        %v300 = vld [vmem:[%s186 + $0x2c] sm:$0xf]
        %v301 = vld [vmem:[%s186 + $0x30] sm:$0xf]
        %v302 = vld [vmem:[%s186 + $0x34] sm:$0xf]
        %v303 = vld [vmem:[%s186 + $0x38] sm:$0xf]
        %v304 = vld [vmem:[%s186 + $0x3c] sm:$0xf]
        %v321 = vunpack.c.l.b16 %v289
        %v322 = vunpack.c.l.b16 %v290
        %v323 = vunpack.c.l.b16 %v291
        %v324 = vunpack.c.l.b16 %v292
        %v325 = vunpack.c.l.b16 %v293
        %v326 = vunpack.c.l.b16 %v294
        %v327 = vunpack.c.l.b16 %v295
        %v328 = vunpack.c.l.b16 %v296
        %v329 = vunpack.c.l.b16 %v297
        %v330 = vunpack.c.l.b16 %v298
        %v331 = vunpack.c.l.b16 %v299
        %v332 = vunpack.c.l.b16 %v300
        %v333 = vunpack.c.l.b16 %v301
        %v334 = vunpack.c.l.b16 %v302
        %v335 = vunpack.c.l.b16 %v303
        %v336 = vunpack.c.l.b16 %v304
        %v337 = vpack.c.b16 %v322, %v321
        %v338 = vpack.c.b16 %v324, %v323
        %v339 = vpack.c.b16 %v326, %v325
        %v340 = vpack.c.b16 %v328, %v327
        %v341 = vpack.c.b16 %v330, %v329
        %v342 = vpack.c.b16 %v332, %v331
        %v343 = vpack.c.b16 %v334, %v333
        %v344 = vpack.c.b16 %v336, %v335
        %353 = vmatprep.subr.bf16.mxu0 0
        %354 = vmatpush1.bf16.msra.mxu0 %v337
        %355 = vmatprep.subr.bf16.mxu0 0
        %356 = vmatpush1.bf16.msra.mxu0 %v338
        %357 = vmatprep.subr.bf16.mxu0 0
        %358 = vmatpush1.bf16.msra.mxu0 %v339
        %359 = vmatprep.subr.bf16.mxu0 0
        %360 = vmatpush1.bf16.msra.mxu0 %v340
        %361 = vmatprep.subr.bf16.mxu0 0
        %362 = vmatpush1.bf16.msra.mxu0 %v341
        %363 = vmatprep.subr.bf16.mxu0 0
        %364 = vmatpush1.bf16.msra.mxu0 %v342
        %365 = vmatprep.subr.bf16.mxu0 0
        %366 = vmatpush1.bf16.msra.mxu0 %v343
        %367 = vmatprep.subr.bf16.mxu0 0
        %368 = vmatpush1.bf16.msra.mxu0 %v344
        %369 = vmatprep.subr.bf16.mxu0 0
        %370 = vmatpush1.bf16.msra.mxu0 0
        %371 = vmatprep.subr.bf16.mxu0 0
        %372 = vmatpush1.bf16.msra.mxu0 0
        %373 = vmatprep.subr.bf16.mxu0 0
        %374 = vmatpush1.bf16.msra.mxu0 0
        %375 = vmatprep.subr.bf16.mxu0 0
        %376 = vmatpush1.bf16.msra.mxu0 0
        %377 = vmatprep.subr.bf16.mxu0 0
        %378 = vmatpush1.bf16.msra.mxu0 0
        %379 = vmatprep.subr.bf16.mxu0 0
        %380 = vmatpush1.bf16.msra.mxu0 0
        %381 = vmatprep.subr.bf16.mxu0 0
        %382 = vmatpush1.bf16.msra.mxu0 0
        %383 = vmatprep.subr.bf16.mxu0 0
        %384 = vmatpush1.bf16.msra.mxu0 0
        %385 = vmatprep.mubr.bf16.mxu0 0
        %386 = vmatmul.mubr.bf16.gmra.mrb[0].mxu0 %v281
        %v387 = vpop.f32.mrb[0].mxu0
        %v388 = vadd.f32 0.0, %v387
        %v389 = vpop.f32.mrb[0].mxu0
        %v390 = vpop.f32.mrb[0].mxu0
        %v391 = vadd.f32 0.0, %v390
        %v392 = vpop.f32.mrb[0].mxu0
        %393 = vmatprep.mubr.bf16.mxu0 0
        %394 = vmatmul.mubr.bf16.gmra.mrb[0].mxu0 %v282
        %v395 = vpop.f32.mrb[0].mxu0
        %v396 = vadd.f32 0.0, %v395
        %v397 = vpop.f32.mrb[0].mxu0
        %v398 = vpop.f32.mrb[0].mxu0
        %v399 = vadd.f32 0.0, %v398
        %v400 = vpop.f32.mrb[0].mxu0
        %401 = vmatprep.mubr.bf16.mxu0 0
        %402 = vmatmul.mubr.bf16.gmra.mrb[0].mxu0 %v283
        %v403 = vpop.f32.mrb[0].mxu0
        %v404 = vadd.f32 0.0, %v403
        %v405 = vpop.f32.mrb[0].mxu0
        %v406 = vpop.f32.mrb[0].mxu0
        %v407 = vadd.f32 0.0, %v406
        %v408 = vpop.f32.mrb[0].mxu0
        %409 = vmatprep.mubr.bf16.mxu0 0
        %410 = vmatmul.mubr.bf16.gmra.mrb[0].mxu0 %v284
        %v411 = vpop.f32.mrb[0].mxu0
        %v412 = vadd.f32 0.0, %v411
        %v413 = vpop.f32.mrb[0].mxu0
        %v414 = vpop.f32.mrb[0].mxu0
        %v415 = vadd.f32 0.0, %v414
        %v416 = vpop.f32.mrb[0].mxu0
        %417 = vmatprep.mubr.bf16.mxu0 0
        %418 = vmatmul.mubr.bf16.gmra.mrb[0].mxu0 %v285
        %v419 = vpop.f32.mrb[0].mxu0
        %v420 = vadd.f32 0.0, %v419
        %v421 = vpop.f32.mrb[0].mxu0
        %v422 = vpop.f32.mrb[0].mxu0
        %v423 = vadd.f32 0.0, %v422
        %v424 = vpop.f32.mrb[0].mxu0
        %425 = vmatprep.mubr.bf16.mxu0 0
        %426 = vmatmul.mubr.bf16.gmra.mrb[0].mxu0 %v286
        %v427 = vpop.f32.mrb[0].mxu0
        %v428 = vadd.f32 0.0, %v427
        %v429 = vpop.f32.mrb[0].mxu0
        %v430 = vpop.f32.mrb[0].mxu0
        %v431 = vadd.f32 0.0, %v430
        %v432 = vpop.f32.mrb[0].mxu0
        %433 = vmatprep.mubr.bf16.mxu0 0
        %434 = vmatmul.mubr.bf16.gmra.mrb[0].mxu0 %v287
        %v435 = vpop.f32.mrb[0].mxu0
        %v436 = vadd.f32 0.0, %v435
        %v437 = vpop.f32.mrb[0].mxu0
        %v438 = vpop.f32.mrb[0].mxu0
        %v439 = vadd.f32 0.0, %v438
        %v440 = vpop.f32.mrb[0].mxu0
        %441 = vmatprep.mubr.bf16.mxu0 0
        %442 = vmatmul.mubr.bf16.gmra.mrb[0].mxu0 %v288
        %v443 = vpop.f32.mrb[0].mxu0
        %v444 = vadd.f32 0.0, %v443
        %v445 = vpop.f32.mrb[0].mxu0
        %v446 = vpop.f32.mrb[0].mxu0
        %v447 = vadd.f32 0.0, %v446
        %v448 = vpop.f32.mrb[0].mxu0
        %449 = vdwg.mxu0
        %v450 = vld [vmem:[#allocation6] sm:$0xf]
        %v451 = vld [vmem:[#allocation6 + $0x4] sm:$0xf]
        %v452 = vld [vmem:[#allocation6 + $0x8] sm:$0xf]
        %v453 = vld [vmem:[#allocation6 + $0xc] sm:$0xf]
        %v454 = vld [vmem:[#allocation6 + $0x10] sm:$0xf]
        %v455 = vld [vmem:[#allocation6 + $0x14] sm:$0xf]
        %v456 = vld [vmem:[#allocation6 + $0x18] sm:$0xf]
        %v457 = vld [vmem:[#allocation6 + $0x1c] sm:$0xf]
        %v458 = vld [vmem:[#allocation6 + $0x20] sm:$0xf]
        %v459 = vld [vmem:[#allocation6 + $0x24] sm:$0xf]
        %v460 = vld [vmem:[#allocation6 + $0x28] sm:$0xf]
        %v461 = vld [vmem:[#allocation6 + $0x2c] sm:$0xf]
        %v462 = vld [vmem:[#allocation6 + $0x30] sm:$0xf]
        %v463 = vld [vmem:[#allocation6 + $0x34] sm:$0xf]
        %v464 = vld [vmem:[#allocation6 + $0x38] sm:$0xf]
        %v465 = vld [vmem:[#allocation6 + $0x3c] sm:$0xf]
        %v466 = vpack.c.bf16 %v391, %v388
        %v467 = vpack.c.bf16 %v399, %v396
        %v468 = vpack.c.bf16 %v407, %v404
        %v469 = vpack.c.bf16 %v415, %v412
        %v470 = vpack.c.bf16 %v423, %v420
        %v471 = vpack.c.bf16 %v431, %v428
        %v472 = vpack.c.bf16 %v439, %v436
        %v473 = vpack.c.bf16 %v447, %v444
        %v490 = vunpack.c.l.b16 %v450
        %v491 = vunpack.c.l.b16 %v451
        %v492 = vunpack.c.l.b16 %v452
        %v493 = vunpack.c.l.b16 %v453
        %v494 = vunpack.c.l.b16 %v454
        %v495 = vunpack.c.l.b16 %v455
        %v496 = vunpack.c.l.b16 %v456
        %v497 = vunpack.c.l.b16 %v457
        %v498 = vunpack.c.l.b16 %v458
        %v499 = vunpack.c.l.b16 %v459
        %v500 = vunpack.c.l.b16 %v460
        %v501 = vunpack.c.l.b16 %v461
        %v502 = vunpack.c.l.b16 %v462
        %v503 = vunpack.c.l.b16 %v463
        %v504 = vunpack.c.l.b16 %v464
        %v505 = vunpack.c.l.b16 %v465
        %v506 = vpack.c.b16 %v491, %v490
        %v507 = vpack.c.b16 %v493, %v492
        %v508 = vpack.c.b16 %v495, %v494
        %v509 = vpack.c.b16 %v497, %v496
        %v510 = vpack.c.b16 %v499, %v498
        %v511 = vpack.c.b16 %v501, %v500
        %v512 = vpack.c.b16 %v503, %v502
        %v513 = vpack.c.b16 %v505, %v504
        %522 = vmatprep.subr.bf16.mxu0 0
        %523 = vmatpush1.bf16.msra.mxu0 %v466
        %524 = vmatprep.subr.bf16.mxu0 0
        %525 = vmatpush1.bf16.msra.mxu0 %v467
        %526 = vmatprep.subr.bf16.mxu0 0
        %527 = vmatpush1.bf16.msra.mxu0 %v468
        %528 = vmatprep.subr.bf16.mxu0 0
        %529 = vmatpush1.bf16.msra.mxu0 %v469
        %530 = vmatprep.subr.bf16.mxu0 0
        %531 = vmatpush1.bf16.msra.mxu0 %v470
        %532 = vmatprep.subr.bf16.mxu0 0
        %533 = vmatpush1.bf16.msra.mxu0 %v471
        %534 = vmatprep.subr.bf16.mxu0 0
        %535 = vmatpush1.bf16.msra.mxu0 %v472
        %536 = vmatprep.subr.bf16.mxu0 0
        %537 = vmatpush1.bf16.msra.mxu0 %v473
        %538 = vmatprep.subr.bf16.mxu0 0
        %539 = vmatpush1.bf16.msra.mxu0 0
        %540 = vmatprep.subr.bf16.mxu0 0
        %541 = vmatpush1.bf16.msra.mxu0 0
        %542 = vmatprep.subr.bf16.mxu0 0
        %543 = vmatpush1.bf16.msra.mxu0 0
        %544 = vmatprep.subr.bf16.mxu0 0
        %545 = vmatpush1.bf16.msra.mxu0 0
        %546 = vmatprep.subr.bf16.mxu0 0
        %547 = vmatpush1.bf16.msra.mxu0 0
        %548 = vmatprep.subr.bf16.mxu0 0
        %549 = vmatpush1.bf16.msra.mxu0 0
        %550 = vmatprep.subr.bf16.mxu0 0
        %551 = vmatpush1.bf16.msra.mxu0 0
        %552 = vmatprep.subr.bf16.mxu0 0
        %553 = vmatpush1.bf16.msra.mxu0 0
        %554 = vmatprep.mubr.bf16.mxu0 0
        %555 = vmatmul.mubr.bf16.gmra.mrb[0].mxu0 %v506
        %v556 = vpop.f32.mrb[0].mxu0
        %v557 = vadd.f32 0.0, %v556
        %v558 = vpop.f32.mrb[0].mxu0
        %v559 = vpop.f32.mrb[0].mxu0
        %v560 = vadd.f32 0.0, %v559
        %v561 = vpop.f32.mrb[0].mxu0
        %562 = vmatprep.mubr.bf16.mxu0 0
        %563 = vmatmul.mubr.bf16.gmra.mrb[0].mxu0 %v507
        %v564 = vpop.f32.mrb[0].mxu0
        %v565 = vadd.f32 0.0, %v564
        %v566 = vpop.f32.mrb[0].mxu0
        %v567 = vpop.f32.mrb[0].mxu0
        %v568 = vadd.f32 0.0, %v567
        %v569 = vpop.f32.mrb[0].mxu0
        %570 = vmatprep.mubr.bf16.mxu0 0
        %571 = vmatmul.mubr.bf16.gmra.mrb[0].mxu0 %v508
        %v572 = vpop.f32.mrb[0].mxu0
        %v573 = vadd.f32 0.0, %v572
        %v574 = vpop.f32.mrb[0].mxu0
        %v575 = vpop.f32.mrb[0].mxu0
        %v576 = vadd.f32 0.0, %v575
        %v577 = vpop.f32.mrb[0].mxu0
        %578 = vmatprep.mubr.bf16.mxu0 0
        %579 = vmatmul.mubr.bf16.gmra.mrb[0].mxu0 %v509
        %v580 = vpop.f32.mrb[0].mxu0
        %v581 = vadd.f32 0.0, %v580
        %v582 = vpop.f32.mrb[0].mxu0
        %v583 = vpop.f32.mrb[0].mxu0
        %v584 = vadd.f32 0.0, %v583
        %v585 = vpop.f32.mrb[0].mxu0
        %586 = vmatprep.mubr.bf16.mxu0 0
        %587 = vmatmul.mubr.bf16.gmra.mrb[0].mxu0 %v510
        %v588 = vpop.f32.mrb[0].mxu0
        %v589 = vadd.f32 0.0, %v588
        %v590 = vpop.f32.mrb[0].mxu0
        %v591 = vpop.f32.mrb[0].mxu0
        %v592 = vadd.f32 0.0, %v591
        %v593 = vpop.f32.mrb[0].mxu0
        %594 = vmatprep.mubr.bf16.mxu0 0
        %595 = vmatmul.mubr.bf16.gmra.mrb[0].mxu0 %v511
        %v596 = vpop.f32.mrb[0].mxu0
        %v597 = vadd.f32 0.0, %v596
        %v598 = vpop.f32.mrb[0].mxu0
        %v599 = vpop.f32.mrb[0].mxu0
        %v600 = vadd.f32 0.0, %v599
        %v601 = vpop.f32.mrb[0].mxu0
        %602 = vmatprep.mubr.bf16.mxu0 0
        %603 = vmatmul.mubr.bf16.gmra.mrb[0].mxu0 %v512
        %v604 = vpop.f32.mrb[0].mxu0
        %v605 = vadd.f32 0.0, %v604
        %v606 = vpop.f32.mrb[0].mxu0
        %v607 = vpop.f32.mrb[0].mxu0
        %v608 = vadd.f32 0.0, %v607
        %v609 = vpop.f32.mrb[0].mxu0
        %610 = vmatprep.mubr.bf16.mxu0 0
        %611 = vmatmul.mubr.bf16.gmra.mrb[0].mxu0 %v513
        %v612 = vpop.f32.mrb[0].mxu0
        %v613 = vadd.f32 0.0, %v612
        %v614 = vpop.f32.mrb[0].mxu0
        %v615 = vpop.f32.mrb[0].mxu0
        %v616 = vadd.f32 0.0, %v615
        %v617 = vpop.f32.mrb[0].mxu0
        %618 = vdwg.mxu0
        %vm619 = vcmp.gt.f32.partialorder %v557, 0.0
        %vm620 = vcmp.gt.f32.partialorder %v560, 0.0
        %vm621 = vcmp.gt.f32.partialorder %v565, 0.0
        %vm622 = vcmp.gt.f32.partialorder %v568, 0.0
        %vm623 = vcmp.gt.f32.partialorder %v573, 0.0
        %vm624 = vcmp.gt.f32.partialorder %v576, 0.0
        %vm625 = vcmp.gt.f32.partialorder %v581, 0.0
        %vm626 = vcmp.gt.f32.partialorder %v584, 0.0
        %vm627 = vcmp.gt.f32.partialorder %v589, 0.0
        %vm628 = vcmp.gt.f32.partialorder %v592, 0.0
        %vm629 = vcmp.gt.f32.partialorder %v597, 0.0
        %vm630 = vcmp.gt.f32.partialorder %v600, 0.0
        %vm631 = vcmp.gt.f32.partialorder %v605, 0.0
        %vm632 = vcmp.gt.f32.partialorder %v608, 0.0
        %vm633 = vcmp.gt.f32.partialorder %v613, 0.0
        %vm634 = vcmp.gt.f32.partialorder %v616, 0.0
        %v635 = vmin.f32 %v557, 0.0
        %v636 = vmin.f32 %v560, 0.0
        %v637 = vmin.f32 %v565, 0.0
        %v638 = vmin.f32 %v568, 0.0
        %v639 = vmin.f32 %v573, 0.0
        %v640 = vmin.f32 %v576, 0.0
        %v641 = vmin.f32 %v581, 0.0
        %v642 = vmin.f32 %v584, 0.0
        %v643 = vmin.f32 %v589, 0.0
        %v644 = vmin.f32 %v592, 0.0
        %v645 = vmin.f32 %v597, 0.0
        %v646 = vmin.f32 %v600, 0.0
        %v647 = vmin.f32 %v605, 0.0
        %v648 = vmin.f32 %v608, 0.0
        %v649 = vmin.f32 %v613, 0.0
        %v650 = vmin.f32 %v616, 0.0
        %v651 = vmul.f32 %v635, 1.442695
        %v652 = vpow.pop %v651
        %v653 = vmul.f32 %v636, 1.442695
        %v654 = vpow.pop %v653
        %v655 = vmul.f32 %v637, 1.442695
        %v656 = vpow.pop %v655
        %v657 = vmul.f32 %v638, 1.442695
        %v658 = vpow.pop %v657
        %v659 = vmul.f32 %v639, 1.442695
        %v660 = vpow.pop %v659
        %v661 = vmul.f32 %v640, 1.442695
        %v662 = vpow.pop %v661
        %v663 = vmul.f32 %v641, 1.442695
        %v664 = vpow.pop %v663
        %v665 = vmul.f32 %v642, 1.442695
        %v666 = vpow.pop %v665
        %v667 = vmul.f32 %v643, 1.442695
        %v668 = vpow.pop %v667
        %v669 = vmul.f32 %v644, 1.442695
        %v670 = vpow.pop %v669
        %v671 = vmul.f32 %v645, 1.442695
        %v672 = vpow.pop %v671
        %v673 = vmul.f32 %v646, 1.442695
        %v674 = vpow.pop %v673
        %v675 = vmul.f32 %v647, 1.442695
        %v676 = vpow.pop %v675
        %v677 = vmul.f32 %v648, 1.442695
        %v678 = vpow.pop %v677
        %v679 = vmul.f32 %v649, 1.442695
        %v680 = vpow.pop %v679
        %v681 = vmul.f32 %v650, 1.442695
        %v682 = vpow.pop %v681
        %v683 = vsub.f32 %v652, 1.0
        %v684 = vsub.f32 %v654, 1.0
        %v685 = vsub.f32 %v656, 1.0
        %v686 = vsub.f32 %v658, 1.0
        %v687 = vsub.f32 %v660, 1.0
        %v688 = vsub.f32 %v662, 1.0
        %v689 = vsub.f32 %v664, 1.0
        %v690 = vsub.f32 %v666, 1.0
        %v691 = vsub.f32 %v668, 1.0
        %v692 = vsub.f32 %v670, 1.0
        %v693 = vsub.f32 %v672, 1.0
        %v694 = vsub.f32 %v674, 1.0
        %v695 = vsub.f32 %v676, 1.0
        %v696 = vsub.f32 %v678, 1.0
        %v697 = vsub.f32 %v680, 1.0
        %v698 = vsub.f32 %v682, 1.0
        %v699 = vsel %vm619, %v557, %v683
        %v700 = vsel %vm620, %v560, %v684
        %v701 = vsel %vm621, %v565, %v685
        %v702 = vsel %vm622, %v568, %v686
        %v703 = vsel %vm623, %v573, %v687
        %v704 = vsel %vm624, %v576, %v688
        %v705 = vsel %vm625, %v581, %v689
        %v706 = vsel %vm626, %v584, %v690
        %v707 = vsel %vm627, %v589, %v691
        %v708 = vsel %vm628, %v592, %v692
        %v709 = vsel %vm629, %v597, %v693
        %v710 = vsel %vm630, %v600, %v694
        %v711 = vsel %vm631, %v605, %v695
        %v712 = vsel %vm632, %v608, %v696
        %v713 = vsel %vm633, %v613, %v697
        %v714 = vsel %vm634, %v616, %v698
        %v715 = vpack.c.bf16 %v700, %v699
        %v716 = vpack.c.bf16 %v702, %v701
        %v717 = vpack.c.bf16 %v704, %v703
        %v718 = vpack.c.bf16 %v706, %v705
        %v719 = vpack.c.bf16 %v708, %v707
        %v720 = vpack.c.bf16 %v710, %v709
        %v721 = vpack.c.bf16 %v712, %v711
        %v722 = vpack.c.bf16 %v714, %v713
        %723 = vst [vmem:[#allocation2] sm:$0xff] %v715
        %724 = vst [vmem:[#allocation2 + $0x8] sm:$0xff] %v716
        %725 = vst [vmem:[#allocation2 + $0x10] sm:$0xff] %v717
        %726 = vst [vmem:[#allocation2 + $0x18] sm:$0xff] %v718
        %727 = vst [vmem:[#allocation2 + $0x20] sm:$0xff] %v719
        %728 = vst [vmem:[#allocation2 + $0x28] sm:$0xff] %v720
        %729 = vst [vmem:[#allocation2 + $0x30] sm:$0xff] %v721
        %730 = vst [vmem:[#allocation2 + $0x38] sm:$0xff] %v722
        %p731 = scmp.eq.s32.totalorder %s17, 1
        // Predicated region
        $region49: #{tpu_custom_call.1} parent=31 // pred_check
          %p732 = pneg %p731
        $region50: #{tpu_custom_call.1} parent=31 // pred_check_branch
          %734 = sbr.rel (%p732) target = $region52
        $region51: #{tpu_custom_call.1} parent=31 // pred_region
          %735 = vst [vmem:[#allocation9] sm:$0xff] %v699
          %736 = vst [vmem:[#allocation9 + $0x8] sm:$0xff] %v700
          %737 = vst [vmem:[#allocation9 + $0x10] sm:$0xff] %v701
          %738 = vst [vmem:[#allocation9 + $0x18] sm:$0xff] %v702
          %739 = vst [vmem:[#allocation9 + $0x20] sm:$0xff] %v703
          %740 = vst [vmem:[#allocation9 + $0x28] sm:$0xff] %v704
          %741 = vst [vmem:[#allocation9 + $0x30] sm:$0xff] %v705
          %742 = vst [vmem:[#allocation9 + $0x38] sm:$0xff] %v706
          %743 = vst [vmem:[#allocation9 + $0x40] sm:$0xff] %v707
          %744 = vst [vmem:[#allocation9 + $0x48] sm:$0xff] %v708
          %745 = vst [vmem:[#allocation9 + $0x50] sm:$0xff] %v709
          %746 = vst [vmem:[#allocation9 + $0x58] sm:$0xff] %v710
          %747 = vst [vmem:[#allocation9 + $0x60] sm:$0xff] %v711
          %748 = vst [vmem:[#allocation9 + $0x68] sm:$0xff] %v712
          %749 = vst [vmem:[#allocation9 + $0x70] sm:$0xff] %v713
          %750 = vst [vmem:[#allocation9 + $0x78] sm:$0xff] %v714
        $region52: #{tpu_custom_call.1} parent=31 // pred_fallthru
          _
        // Predicated region
        $region53: #{tpu_custom_call.1} parent=31 // pred_check
          %p751 = pneg %p98
        $region54: #{tpu_custom_call.1} parent=31 // pred_check_branch
          %753 = sbr.rel (%p751) target = $region56
        $region55: #{tpu_custom_call.1} parent=31 // pred_region
          %s755 = ssub.s32 2048, 2048
          %756 = vsyncadd [#allocation5], %s755
          %s757 = sshll.u32 [#allocation9], 4
          %s758 = int_to_ptr.vmem [resolvable:$true] %s757
          %763 = dma.vmem_to_hbm [thread:$0]  %s758, 2048, %s3, [#allocation5], 128, 128, 8
        $region56: #{tpu_custom_call.1} parent=31 // pred_fallthru
          _
        // Predicated region
        $region57: #{tpu_custom_call.1} parent=31 // pred_check
          %p764 = pneg %p98
        $region58: #{tpu_custom_call.1} parent=31 // pred_check_branch
          %766 = sbr.rel (%p764) target = $region60
        $region59: #{tpu_custom_call.1} parent=31 // pred_region
          %767 = dma.done [#allocation5], 2048
        $region60: #{tpu_custom_call.1} parent=31 // pred_fallthru
          _
      $region32: #{tpu_custom_call.1} parent=5 // pred_fallthru
        _
      %p768 = scmp.le.s32.totalorder 2, %s12
      // Predicated region
      $region61: #{tpu_custom_call.1} parent=5 // pred_check
        %p769 = pneg %p768
      $region62: #{tpu_custom_call.1} parent=5 // pred_check_branch
        %771 = sbr.rel (%p769) target = $region64
      $region63: #{tpu_custom_call.1} parent=5 // pred_region
        %s772 = ssub.s32 %s12, 2
      $region64: #{tpu_custom_call.1} parent=5 // pred_fallthru
        _
    $region6: #{tpu_custom_call.1} parent=1 // loop_footer
      %s16 = sadd.s32 1, %s12
    $region7: #{tpu_custom_call.1} parent=1 // loop_footer_branch
      %11 = sbr.rel target = $region3
    $region8: #{tpu_custom_call.1} parent=1 // loop_exit
      _
    %773 = vsyncpa [#allocation4], 1
    %s774 = scalar_lea.sflag [#allocation4], 1
    %775 = vsyncpa %s774, 1
    %776 = vsyncpa [#allocation7], 1
    %777 = vsyncpa [#allocation5], 1
    %s778 = scalar_lea.sflag [#allocation5], 1
    %779 = vsyncpa %s778, 1

</llo_original>
